<compile_context>
chip_gen: v5e
topology: v5e:2x2
jax: 0.10.0
libtpu: 0.0.40
codegen_flags: <defaults>
</compile_context>

<pallas_src>
import functools

import jax
import jax.numpy as jnp
from jax.experimental import pallas as pl
from jax.experimental.pallas import tpu as pltpu


def _round_up(x, m):
    return (x + m - 1) // m * m


def _crf_forward_kernel(maxlen_ref, h_ref, len_ref, transT_ref, stop_ref,
                        out_ref, score_ref, *, stop_id, t_chunk, unroll):
    """One (batch-tile, time-chunk) grid step of the CRF forward recursion.

    maxlen_ref: SMEM (num_b_tiles,) i32  max sequence length per batch tile
    h_ref:      (T_CHUNK, N, B_TILE)     emissions (original dtype), batch on lanes
    len_ref:    (1, B_TILE) i32          per-sequence lengths
    transT_ref: (N, N) f32               trans.T  (transT[j, i] = trans[i, j])
    stop_ref:   (N, 1) f32               trans[stop_id, :] as a column
    out_ref:    (1, B_TILE) f32          log partition (written on last chunk)
    score_ref:  VMEM (N, B_TILE) f32     forward-recursion carry
    """
    num_tags, b_tile = score_ref.shape
    b_idx = pl.program_id(0)
    t_idx = pl.program_id(1)
    n_t = pl.num_programs(1)
    base_t = t_idx * t_chunk

    # ---- init the carry on the first time-chunk of each batch tile ----
    @pl.when(t_idx == 0)
    def _init():
        tag_ids = jax.lax.broadcasted_iota(jnp.int32, (num_tags, b_tile), 0)
        score_ref[...] = jnp.where(tag_ids == stop_id, 0.0, -10000.0).astype(
            jnp.float32)

    max_len = maxlen_ref[b_idx]

    # ---- scan this chunk's timesteps (skipped if the whole chunk is padding) ----
    @pl.when(base_t < max_len)
    def _scan():
        transT = transT_ref[...].astype(jnp.float32)    # (N, N), fetched once
        transT_b = transT[:, :, None]                   # hoisted broadcast operand
        lens = len_ref[...]                             # (1, B_TILE) int32
        score0 = score_ref[...]

        def step(s, score):
            # Garbage data in Pallas edge-padding (partial tail chunk /
            # partial batch tile) is discarded by the length mask / the
            # masked output writeback; do not drop these guards.
            emit = h_ref[s].astype(jnp.float32)          # (N, B_TILE)
            # x[j, i, b] = score[j, b] + trans[i, j]; reduce over j (axis 0)
            # is a cheap cross-vreg VPU reduction.
            x = score[:, None, :] + transT_b             # (N, N, B_TILE)
            m = jnp.max(x, axis=0)                       # (N, B_TILE)
            lse = m + jnp.log(jnp.sum(jnp.exp(x - m[None, :, :]), axis=0))
            score_t = lse + emit                         # emit hoisted out of LSE
            mask_t = (base_t + s) < lens                 # (1, B_TILE) bool
            return jnp.where(mask_t, score_t, score)

        score_ref[...] = jax.lax.fori_loop(0, t_chunk, step, score0,
                                           unroll=unroll)

    # ---- finalize on the last time-chunk ----
    @pl.when(t_idx == n_t - 1)
    def _finalize():
        fin = score_ref[...] + stop_ref[...]             # (N, B_TILE) + (N, 1)
        m = jnp.max(fin, axis=0, keepdims=True)          # (1, B_TILE)
        out_ref[...] = m + jnp.log(
            jnp.sum(jnp.exp(fin - m), axis=0, keepdims=True))


def crf_forward(h_tag, mask, trans, stop_id, *, t_chunk=None, b_tile=None):
    """h_tag: (B, T, N), mask: (B, T) prefix mask, trans: (N, N) -> (B,) log Z.

    NOTE: the mask is assumed to be a prefix (length) mask, as is standard
    for CRF sequence batching; it is reduced to per-sequence lengths.
    """
    B, T, N = h_tag.shape

    # Batch tile = lane dim: must be a multiple of 128 or equal to B.
    # For B > 128 the default of 128 yields >=2 blocks on the "parallel"
    # batch axis, so both v7x TensorCores are used.
    if b_tile is None:
        b_tile = B if B <= 128 else 128
    b_tile = min(int(b_tile), B)
    if b_tile != B and b_tile % 128 != 0:
        raise ValueError("b_tile must be a multiple of 128 or equal to B")

    # Time chunk: leading block dim, no (8,128) constraint; default 256 steps
    # amortizes the ~0.35 us per-grid-step overhead.
    if t_chunk is None:
        t_chunk = T if T <= 256 else 256
    t_chunk = min(int(t_chunk), T)

    num_b = pl.cdiv(B, b_tile)
    num_t = pl.cdiv(T, t_chunk)
    grid = (num_b, num_t)

    # One wrapper transpose to the lane-dense (T, N, B) layout; emissions keep
    # their original dtype (bf16 passes straight through; kernel casts per chunk).
    h_tnb = jnp.transpose(h_tag, (1, 2, 0))

    lengths = jnp.sum(mask.astype(jnp.int32), axis=1).astype(jnp.int32)  # (B,)
    lens2 = lengths.reshape(1, B)

    # Scalar-prefetched per-tile max length -> skip fully-padded trailing chunks.
    pad_b = num_b * b_tile - B
    len_pad = jnp.pad(lengths, (0, pad_b), constant_values=0)
    maxlen = jnp.max(len_pad.reshape(num_b, b_tile), axis=1).astype(jnp.int32)

    transT = jnp.swapaxes(trans.astype(jnp.float32), 0, 1)          # (N, N)
    stop_vec = trans[stop_id, :].astype(jnp.float32).reshape(N, 1)  # (N, 1)

    # (8,128)-padding-aware VMEM estimate (double-buffered inputs/outputs +
    # carry), clamped to <=32 MiB so the same tiling is v7x-safe.
    n_pad = _round_up(N, 8)
    b_pad = _round_up(b_tile, 128)
    itemsize = jnp.dtype(h_tag.dtype).itemsize
    est = (2 * t_chunk * n_pad * b_pad * itemsize   # emissions
           + 2 * 8 * b_pad * 4                      # lengths (sublane pad 1->8)
           + 2 * n_pad * 128 * 4                    # transT
           + 2 * n_pad * 128 * 4                    # stop_vec
           + 2 * 8 * b_pad * 4                      # output
           + n_pad * b_pad * 4)                     # carry scratch
    vmem_limit = int(min(32 * 1024 * 1024, max(16 * 1024 * 1024, 2 * est)))

    kernel = functools.partial(_crf_forward_kernel, stop_id=int(stop_id),
                               t_chunk=t_chunk, unroll=min(8, t_chunk))

    out = pl.pallas_call(
        kernel,
        out_shape=jax.ShapeDtypeStruct((1, B), jnp.float32),
        grid_spec=pltpu.PrefetchScalarGridSpec(
            num_scalar_prefetch=1,
            grid=grid,
            in_specs=[
                pl.BlockSpec((t_chunk, N, b_tile), lambda b, t, ml: (t, 0, b)),
                pl.BlockSpec((1, b_tile), lambda b, t, ml: (0, b)),
                pl.BlockSpec((N, N), lambda b, t, ml: (0, 0)),
                pl.BlockSpec((N, 1), lambda b, t, ml: (0, 0)),
            ],
            out_specs=pl.BlockSpec((1, b_tile), lambda b, t, ml: (0, b)),
            scratch_shapes=[pltpu.VMEM((N, b_tile), jnp.float32)],
        ),
        compiler_params=pltpu.CompilerParams(
            dimension_semantics=("parallel", "arbitrary"),
            vmem_limit_bytes=vmem_limit,
        ),
    )(maxlen, h_tnb, lens2, transT, stop_vec)
    return out[0]


def crf_forward_ref(h_tag, mask, trans, stop_id):
    """Pure-JAX reference mirroring the PyTorch forward() exactly."""
    B, T, N = h_tag.shape

    def lse(x):
        m = jnp.max(x, -1)
        return m + jnp.log(jnp.sum(jnp.exp(x - m[..., None]), -1))

    score = jnp.full((B, N), -10000.0, dtype=jnp.float32).at[:, stop_id].set(0.0)
    for t in range(T):
        mask_t = mask[:, t][:, None]
        emit_t = h_tag[:, t][:, :, None]
        score_t = lse(score[:, None, :] + emit_t + trans[None, :, :])
        score = score_t * mask_t + score * (1.0 - mask_t)
    score = score + trans[stop_id]
    return lse(score)


if __name__ == "__main__":
    num_tags = 8
    start_id, stop_id, pad_id = 5, 6, 7

    key = jax.random.PRNGKey(0)
    k_trans, k_e1, k_e2, k_e3, k_l1, k_l2 = jax.random.split(key, 6)

    # Deterministic parameter init mirroring CRF.__init__
    trans = jax.random.normal(k_trans, (num_tags, num_tags), dtype=jnp.float32)
    trans = trans.at[start_id, :].set(-10000.0)
    trans = trans.at[:, stop_id].set(-10000.0)
    trans = trans.at[:, pad_id].set(-10000.0)
    trans = trans.at[pad_id, :].set(-10000.0)
    trans = trans.at[pad_id, stop_id].set(0.0)
    trans = trans.at[pad_id, pad_id].set(0.0)

    # Case 1: small (B=2, T=8) -> single time chunk, single batch tile.
    B, T = 2, 8
    h1 = jax.random.normal(k_e1, (B, T, num_tags), dtype=jnp.float32)
    len1 = jnp.array([T, 5], dtype=jnp.int32)
    mask1 = (jnp.arange(T)[None, :] < len1[:, None]).astype(jnp.float32)
    out1 = jax.block_until_ready(crf_forward(h1, mask1, trans, stop_id))
    ref1 = crf_forward_ref(h1, mask1, trans, stop_id)
    assert out1.shape == (B,)
    assert jnp.allclose(out1, ref1, atol=1e-3, rtol=1e-3), (out1, ref1)

    # Case 2: T=20 with t_chunk=8 -> pipelined multi-chunk grid + partial tail
    # chunk handled by the in-kernel length mask.
    B2, T2 = 2, 20
    h2 = jax.random.normal(k_e2, (B2, T2, num_tags), dtype=jnp.float32)
    len2 = jnp.array([T2, 13], dtype=jnp.int32)
    mask2 = (jnp.arange(T2)[None, :] < len2[:, None]).astype(jnp.float32)
    out2 = jax.block_until_ready(crf_forward(h2, mask2, trans, stop_id, t_chunk=8))
    ref2 = crf_forward_ref(h2, mask2, trans, stop_id)
    assert jnp.allclose(out2, ref2, atol=1e-3, rtol=1e-3), (out2, ref2)

    # Case 3: B=192 (two lane-tiles of 128, the second partial), T=48,
    # t_chunk=16 -> multi-tile batch, partial batch tile, and the per-tile
    # max-length gate (second tile's lengths <= 10, so its last two time
    # chunks are skipped entirely).
    B3, T3 = 192, 48
    h3 = jax.random.normal(k_e3, (B3, T3, num_tags), dtype=jnp.float32)
    la = jax.random.randint(k_l1, (128,), 1, T3 + 1)
    lb = jax.random.randint(k_l2, (64,), 1, 11)
    len3 = jnp.concatenate([la, lb]).astype(jnp.int32)
    mask3 = (jnp.arange(T3)[None, :] < len3[:, None]).astype(jnp.float32)
    out3 = jax.block_until_ready(
        crf_forward(h3, mask3, trans, stop_id, t_chunk=16))
    ref3 = crf_forward_ref(h3, mask3, trans, stop_id)
    assert jnp.allclose(out3, ref3, atol=1e-3, rtol=1e-3), (out3, ref3)

    # TODO(synk): decode() (Viterbi backtrace into Python lists) and score()
    # (gold-path gather) are host-side / data-dependent-gather routines and are
    # not implemented as Pallas kernels here.
    print("KERNEL_OK")
</pallas_src>

<mosaic_0001>
module attributes {stable_mosaic.version = 11 : i64} {
  func.func @_crf_forward_kernel(%arg0: i32, %arg1: i32, %arg2: memref<1xi32, #tpu.memory_space<smem>>, %arg3: memref<8x8x2xf32, #tpu.memory_space<vmem>>, %arg4: memref<1x2xi32, #tpu.memory_space<vmem>>, %arg5: memref<8x8xf32, #tpu.memory_space<vmem>>, %arg6: memref<8x1xf32, #tpu.memory_space<vmem>>, %arg7: memref<1x2xf32, #tpu.memory_space<vmem>>, %arg8: memref<8x2xf32, #tpu.memory_space<vmem>>) attributes {dimension_semantics = [#tpu.dimension_semantics<parallel>, #tpu.dimension_semantics<arbitrary>], iteration_bounds = array<i64: 1, 1>, scalar_prefetch = 1 : i64, scratch_operands = 1 : i64, tpu.core_type = #tpu.core_type<tc>, window_params = [{transform_indices = @transform_0, window_bounds = array<i64: 8, 8, 2>}, {transform_indices = @transform_1, window_bounds = array<i64: 1, 2>}, {pipeline_mode = #tpu.pipeline_mode<synchronous>, transform_indices = @transform_2, window_bounds = array<i64: 8, 8>}, {pipeline_mode = #tpu.pipeline_mode<synchronous>, transform_indices = @transform_3, window_bounds = array<i64: 8, 1>}, {transform_indices = @transform_4, window_bounds = array<i64: 1, 2>}]} {
    %c8_i32 = arith.constant 8 : i32
    %0 = arith.muli %arg1, %c8_i32 : i32
    %c0_i32 = arith.constant 0 : i32
    %1 = arith.cmpi eq, %arg1, %c0_i32 : i32
    %2 = arith.extui %1 : i1 to i32
    %c0_i32_0 = arith.constant 0 : i32
    %3 = arith.cmpi ne, %2, %c0_i32_0 : i32
    scf.if %3 {
      %12 = tpu.iota {dimensions = array<i32: 0>} : vector<8x2xi32>
      %c6_i32 = arith.constant 6 : i32
      %13 = vector.broadcast %c6_i32 : i32 to vector<8x2xi32>
      %14 = arith.cmpi eq, %12, %13 : vector<8x2xi32>
      %cst = arith.constant 0.000000e+00 : f32
      %cst_4 = arith.constant -1.000000e+04 : f32
      %15 = vector.broadcast %cst : f32 to vector<8x2xf32>
      %16 = vector.broadcast %cst_4 : f32 to vector<8x2xf32>
      %17 = arith.select %14, %15, %16 : vector<8x2xi1>, vector<8x2xf32>
      %c0 = arith.constant 0 : index
      %c0_5 = arith.constant 0 : index
      %18 = vector.load %arg8[%c0, %c0_5] : memref<8x2xf32, #tpu.memory_space<vmem>>, vector<8x2xf32>
      tpu.vector_store %arg8[%c0, %c0_5], %17 {strides = array<i32>} : memref<8x2xf32, #tpu.memory_space<vmem>>, vector<8x2xf32>,
    } else {
    }
    %4 = arith.index_cast %arg0 : i32 to index
    %5 = memref.load %arg2[%4] : memref<1xi32, #tpu.memory_space<smem>>
    %6 = arith.cmpi slt, %0, %5 : i32
    %7 = arith.extui %6 : i1 to i32
    %c0_i32_1 = arith.constant 0 : i32
    %8 = arith.cmpi ne, %7, %c0_i32_1 : i32
    scf.if %8 {
      %c0 = arith.constant 0 : index
      %c0_4 = arith.constant 0 : index
      %12 = vector.load %arg5[%c0, %c0_4] : memref<8x8xf32, #tpu.memory_space<vmem>>, vector<8x8xf32>
      %13 = vector.shape_cast %12 : vector<8x8xf32> to vector<8x8x1xf32>
      %c0_5 = arith.constant 0 : index
      %c0_6 = arith.constant 0 : index
      %14 = vector.load %arg4[%c0_5, %c0_6] : memref<1x2xi32, #tpu.memory_space<vmem>>, vector<1x2xi32>
      %c0_7 = arith.constant 0 : index
      %c0_8 = arith.constant 0 : index
      %15 = vector.load %arg8[%c0_7, %c0_8] : memref<8x2xf32, #tpu.memory_space<vmem>>, vector<8x2xf32>
      %c0_i32_9 = arith.constant 0 : i32
      %16 = arith.index_cast %c0_i32_9 : i32 to index
      %c0_10 = arith.constant 0 : index
      %c0_11 = arith.constant 0 : index
      %17 = vector.load %arg3[%16, %c0_10, %c0_11] : memref<8x8x2xf32, #tpu.memory_space<vmem>>, vector<1x8x2xf32>
      %18 = vector.shape_cast %17 : vector<1x8x2xf32> to vector<8x2xf32>
      %19 = vector.shape_cast %15 : vector<8x2xf32> to vector<8x1x2xf32>
      %20 = vector.broadcast %19 : vector<8x1x2xf32> to vector<8x8x2xf32>
      %21 = vector.broadcast %13 : vector<8x8x1xf32> to vector<8x8x2xf32>
      %22 = arith.addf %20, %21 : vector<8x8x2xf32>
      %cst = arith.constant dense<0xFF800000> : vector<8x2xf32>
      %23 = vector.multi_reduction <maximumf>, %22, %cst [0] : vector<8x8x2xf32> to vector<8x2xf32>
      %24 = vector.shape_cast %23 : vector<8x2xf32> to vector<1x8x2xf32>
      %25 = vector.broadcast %24 : vector<1x8x2xf32> to vector<8x8x2xf32>
      %26 = arith.subf %22, %25 : vector<8x8x2xf32>
      %27 = math.exp %26 : vector<8x8x2xf32>
      %cst_12 = arith.constant dense<0.000000e+00> : vector<8x2xf32>
      %28 = vector.multi_reduction <add>, %27, %cst_12 [0] : vector<8x8x2xf32> to vector<8x2xf32>
      %29 = math.log %28 : vector<8x2xf32>
      %30 = arith.addf %23, %29 : vector<8x2xf32>
      %31 = arith.addf %30, %18 : vector<8x2xf32>
      %32 = arith.addi %0, %c0_i32_9 : i32
      %33 = vector.broadcast %32 : i32 to vector<1x2xi32>
      %34 = arith.cmpi slt, %33, %14 : vector<1x2xi32>
      %35 = vector.shape_cast %34 : vector<1x2xi1> to vector<1x2xi1>
      %36 = vector.broadcast %35 : vector<1x2xi1> to vector<8x2xi1>
      %37 = arith.select %36, %31, %15 : vector<8x2xi1>, vector<8x2xf32>
      %c1_i32 = arith.constant 1 : i32
      %38 = arith.index_cast %c1_i32 : i32 to index
      %c0_13 = arith.constant 0 : index
      %c0_14 = arith.constant 0 : index
      %39 = vector.load %arg3[%38, %c0_13, %c0_14] : memref<8x8x2xf32, #tpu.memory_space<vmem>>, vector<1x8x2xf32>
      %40 = vector.shape_cast %39 : vector<1x8x2xf32> to vector<8x2xf32>
      %41 = vector.shape_cast %37 : vector<8x2xf32> to vector<8x1x2xf32>
      %42 = vector.broadcast %41 : vector<8x1x2xf32> to vector<8x8x2xf32>
      %43 = vector.broadcast %13 : vector<8x8x1xf32> to vector<8x8x2xf32>
      %44 = arith.addf %42, %43 : vector<8x8x2xf32>
      %cst_15 = arith.constant dense<0xFF800000> : vector<8x2xf32>
      %45 = vector.multi_reduction <maximumf>, %44, %cst_15 [0] : vector<8x8x2xf32> to vector<8x2xf32>
      %46 = vector.shape_cast %45 : vector<8x2xf32> to vector<1x8x2xf32>
      %47 = vector.broadcast %46 : vector<1x8x2xf32> to vector<8x8x2xf32>
      %48 = arith.subf %44, %47 : vector<8x8x2xf32>
      %49 = math.exp %48 : vector<8x8x2xf32>
      %cst_16 = arith.constant dense<0.000000e+00> : vector<8x2xf32>
      %50 = vector.multi_reduction <add>, %49, %cst_16 [0] : vector<8x8x2xf32> to vector<8x2xf32>
      %51 = math.log %50 : vector<8x2xf32>
      %52 = arith.addf %45, %51 : vector<8x2xf32>
      %53 = arith.addf %52, %40 : vector<8x2xf32>
      %54 = arith.addi %0, %c1_i32 : i32
      %55 = vector.broadcast %54 : i32 to vector<1x2xi32>
      %56 = arith.cmpi slt, %55, %14 : vector<1x2xi32>
      %57 = vector.shape_cast %56 : vector<1x2xi1> to vector<1x2xi1>
      %58 = vector.broadcast %57 : vector<1x2xi1> to vector<8x2xi1>
      %59 = arith.select %58, %53, %37 : vector<8x2xi1>, vector<8x2xf32>
      %c2_i32 = arith.constant 2 : i32
      %60 = arith.index_cast %c2_i32 : i32 to index
      %c0_17 = arith.constant 0 : index
      %c0_18 = arith.constant 0 : index
      %61 = vector.load %arg3[%60, %c0_17, %c0_18] : memref<8x8x2xf32, #tpu.memory_space<vmem>>, vector<1x8x2xf32>
      %62 = vector.shape_cast %61 : vector<1x8x2xf32> to vector<8x2xf32>
      %63 = vector.shape_cast %59 : vector<8x2xf32> to vector<8x1x2xf32>
      %64 = vector.broadcast %63 : vector<8x1x2xf32> to vector<8x8x2xf32>
      %65 = vector.broadcast %13 : vector<8x8x1xf32> to vector<8x8x2xf32>
      %66 = arith.addf %64, %65 : vector<8x8x2xf32>
      %cst_19 = arith.constant dense<0xFF800000> : vector<8x2xf32>
      %67 = vector.multi_reduction <maximumf>, %66, %cst_19 [0] : vector<8x8x2xf32> to vector<8x2xf32>
      %68 = vector.shape_cast %67 : vector<8x2xf32> to vector<1x8x2xf32>
      %69 = vector.broadcast %68 : vector<1x8x2xf32> to vector<8x8x2xf32>
      %70 = arith.subf %66, %69 : vector<8x8x2xf32>
      %71 = math.exp %70 : vector<8x8x2xf32>
      %cst_20 = arith.constant dense<0.000000e+00> : vector<8x2xf32>
      %72 = vector.multi_reduction <add>, %71, %cst_20 [0] : vector<8x8x2xf32> to vector<8x2xf32>
      %73 = math.log %72 : vector<8x2xf32>
      %74 = arith.addf %67, %73 : vector<8x2xf32>
      %75 = arith.addf %74, %62 : vector<8x2xf32>
      %76 = arith.addi %0, %c2_i32 : i32
      %77 = vector.broadcast %76 : i32 to vector<1x2xi32>
      %78 = arith.cmpi slt, %77, %14 : vector<1x2xi32>
      %79 = vector.shape_cast %78 : vector<1x2xi1> to vector<1x2xi1>
      %80 = vector.broadcast %79 : vector<1x2xi1> to vector<8x2xi1>
      %81 = arith.select %80, %75, %59 : vector<8x2xi1>, vector<8x2xf32>
      %c3_i32 = arith.constant 3 : i32
      %82 = arith.index_cast %c3_i32 : i32 to index
      %c0_21 = arith.constant 0 : index
      %c0_22 = arith.constant 0 : index
      %83 = vector.load %arg3[%82, %c0_21, %c0_22] : memref<8x8x2xf32, #tpu.memory_space<vmem>>, vector<1x8x2xf32>
      %84 = vector.shape_cast %83 : vector<1x8x2xf32> to vector<8x2xf32>
      %85 = vector.shape_cast %81 : vector<8x2xf32> to vector<8x1x2xf32>
      %86 = vector.broadcast %85 : vector<8x1x2xf32> to vector<8x8x2xf32>
      %87 = vector.broadcast %13 : vector<8x8x1xf32> to vector<8x8x2xf32>
      %88 = arith.addf %86, %87 : vector<8x8x2xf32>
      %cst_23 = arith.constant dense<0xFF800000> : vector<8x2xf32>
      %89 = vector.multi_reduction <maximumf>, %88, %cst_23 [0] : vector<8x8x2xf32> to vector<8x2xf32>
      %90 = vector.shape_cast %89 : vector<8x2xf32> to vector<1x8x2xf32>
      %91 = vector.broadcast %90 : vector<1x8x2xf32> to vector<8x8x2xf32>
      %92 = arith.subf %88, %91 : vector<8x8x2xf32>
      %93 = math.exp %92 : vector<8x8x2xf32>
      %cst_24 = arith.constant dense<0.000000e+00> : vector<8x2xf32>
      %94 = vector.multi_reduction <add>, %93, %cst_24 [0] : vector<8x8x2xf32> to vector<8x2xf32>
      %95 = math.log %94 : vector<8x2xf32>
      %96 = arith.addf %89, %95 : vector<8x2xf32>
      %97 = arith.addf %96, %84 : vector<8x2xf32>
      %98 = arith.addi %0, %c3_i32 : i32
      %99 = vector.broadcast %98 : i32 to vector<1x2xi32>
      %100 = arith.cmpi slt, %99, %14 : vector<1x2xi32>
      %101 = vector.shape_cast %100 : vector<1x2xi1> to vector<1x2xi1>
      %102 = vector.broadcast %101 : vector<1x2xi1> to vector<8x2xi1>
      %103 = arith.select %102, %97, %81 : vector<8x2xi1>, vector<8x2xf32>
      %c4_i32 = arith.constant 4 : i32
      %104 = arith.index_cast %c4_i32 : i32 to index
      %c0_25 = arith.constant 0 : index
      %c0_26 = arith.constant 0 : index
      %105 = vector.load %arg3[%104, %c0_25, %c0_26] : memref<8x8x2xf32, #tpu.memory_space<vmem>>, vector<1x8x2xf32>
      %106 = vector.shape_cast %105 : vector<1x8x2xf32> to vector<8x2xf32>
      %107 = vector.shape_cast %103 : vector<8x2xf32> to vector<8x1x2xf32>
      %108 = vector.broadcast %107 : vector<8x1x2xf32> to vector<8x8x2xf32>
      %109 = vector.broadcast %13 : vector<8x8x1xf32> to vector<8x8x2xf32>
      %110 = arith.addf %108, %109 : vector<8x8x2xf32>
      %cst_27 = arith.constant dense<0xFF800000> : vector<8x2xf32>
      %111 = vector.multi_reduction <maximumf>, %110, %cst_27 [0] : vector<8x8x2xf32> to vector<8x2xf32>
      %112 = vector.shape_cast %111 : vector<8x2xf32> to vector<1x8x2xf32>
      %113 = vector.broadcast %112 : vector<1x8x2xf32> to vector<8x8x2xf32>
      %114 = arith.subf %110, %113 : vector<8x8x2xf32>
      %115 = math.exp %114 : vector<8x8x2xf32>
      %cst_28 = arith.constant dense<0.000000e+00> : vector<8x2xf32>
      %116 = vector.multi_reduction <add>, %115, %cst_28 [0] : vector<8x8x2xf32> to vector<8x2xf32>
      %117 = math.log %116 : vector<8x2xf32>
      %118 = arith.addf %111, %117 : vector<8x2xf32>
      %119 = arith.addf %118, %106 : vector<8x2xf32>
      %120 = arith.addi %0, %c4_i32 : i32
      %121 = vector.broadcast %120 : i32 to vector<1x2xi32>
      %122 = arith.cmpi slt, %121, %14 : vector<1x2xi32>
      %123 = vector.shape_cast %122 : vector<1x2xi1> to vector<1x2xi1>
      %124 = vector.broadcast %123 : vector<1x2xi1> to vector<8x2xi1>
      %125 = arith.select %124, %119, %103 : vector<8x2xi1>, vector<8x2xf32>
      %c5_i32 = arith.constant 5 : i32
      %126 = arith.index_cast %c5_i32 : i32 to index
      %c0_29 = arith.constant 0 : index
      %c0_30 = arith.constant 0 : index
      %127 = vector.load %arg3[%126, %c0_29, %c0_30] : memref<8x8x2xf32, #tpu.memory_space<vmem>>, vector<1x8x2xf32>
      %128 = vector.shape_cast %127 : vector<1x8x2xf32> to vector<8x2xf32>
      %129 = vector.shape_cast %125 : vector<8x2xf32> to vector<8x1x2xf32>
      %130 = vector.broadcast %129 : vector<8x1x2xf32> to vector<8x8x2xf32>
      %131 = vector.broadcast %13 : vector<8x8x1xf32> to vector<8x8x2xf32>
      %132 = arith.addf %130, %131 : vector<8x8x2xf32>
      %cst_31 = arith.constant dense<0xFF800000> : vector<8x2xf32>
      %133 = vector.multi_reduction <maximumf>, %132, %cst_31 [0] : vector<8x8x2xf32> to vector<8x2xf32>
      %134 = vector.shape_cast %133 : vector<8x2xf32> to vector<1x8x2xf32>
      %135 = vector.broadcast %134 : vector<1x8x2xf32> to vector<8x8x2xf32>
      %136 = arith.subf %132, %135 : vector<8x8x2xf32>
      %137 = math.exp %136 : vector<8x8x2xf32>
      %cst_32 = arith.constant dense<0.000000e+00> : vector<8x2xf32>
      %138 = vector.multi_reduction <add>, %137, %cst_32 [0] : vector<8x8x2xf32> to vector<8x2xf32>
      %139 = math.log %138 : vector<8x2xf32>
      %140 = arith.addf %133, %139 : vector<8x2xf32>
      %141 = arith.addf %140, %128 : vector<8x2xf32>
      %142 = arith.addi %0, %c5_i32 : i32
      %143 = vector.broadcast %142 : i32 to vector<1x2xi32>
      %144 = arith.cmpi slt, %143, %14 : vector<1x2xi32>
      %145 = vector.shape_cast %144 : vector<1x2xi1> to vector<1x2xi1>
      %146 = vector.broadcast %145 : vector<1x2xi1> to vector<8x2xi1>
      %147 = arith.select %146, %141, %125 : vector<8x2xi1>, vector<8x2xf32>
      %c6_i32 = arith.constant 6 : i32
      %148 = arith.index_cast %c6_i32 : i32 to index
      %c0_33 = arith.constant 0 : index
      %c0_34 = arith.constant 0 : index
      %149 = vector.load %arg3[%148, %c0_33, %c0_34] : memref<8x8x2xf32, #tpu.memory_space<vmem>>, vector<1x8x2xf32>
      %150 = vector.shape_cast %149 : vector<1x8x2xf32> to vector<8x2xf32>
      %151 = vector.shape_cast %147 : vector<8x2xf32> to vector<8x1x2xf32>
      %152 = vector.broadcast %151 : vector<8x1x2xf32> to vector<8x8x2xf32>
      %153 = vector.broadcast %13 : vector<8x8x1xf32> to vector<8x8x2xf32>
      %154 = arith.addf %152, %153 : vector<8x8x2xf32>
      %cst_35 = arith.constant dense<0xFF800000> : vector<8x2xf32>
      %155 = vector.multi_reduction <maximumf>, %154, %cst_35 [0] : vector<8x8x2xf32> to vector<8x2xf32>
      %156 = vector.shape_cast %155 : vector<8x2xf32> to vector<1x8x2xf32>
      %157 = vector.broadcast %156 : vector<1x8x2xf32> to vector<8x8x2xf32>
      %158 = arith.subf %154, %157 : vector<8x8x2xf32>
      %159 = math.exp %158 : vector<8x8x2xf32>
      %cst_36 = arith.constant dense<0.000000e+00> : vector<8x2xf32>
      %160 = vector.multi_reduction <add>, %159, %cst_36 [0] : vector<8x8x2xf32> to vector<8x2xf32>
      %161 = math.log %160 : vector<8x2xf32>
      %162 = arith.addf %155, %161 : vector<8x2xf32>
      %163 = arith.addf %162, %150 : vector<8x2xf32>
      %164 = arith.addi %0, %c6_i32 : i32
      %165 = vector.broadcast %164 : i32 to vector<1x2xi32>
      %166 = arith.cmpi slt, %165, %14 : vector<1x2xi32>
      %167 = vector.shape_cast %166 : vector<1x2xi1> to vector<1x2xi1>
      %168 = vector.broadcast %167 : vector<1x2xi1> to vector<8x2xi1>
      %169 = arith.select %168, %163, %147 : vector<8x2xi1>, vector<8x2xf32>
      %c7_i32 = arith.constant 7 : i32
      %170 = arith.index_cast %c7_i32 : i32 to index
      %c0_37 = arith.constant 0 : index
      %c0_38 = arith.constant 0 : index
      %171 = vector.load %arg3[%170, %c0_37, %c0_38] : memref<8x8x2xf32, #tpu.memory_space<vmem>>, vector<1x8x2xf32>
      %172 = vector.shape_cast %171 : vector<1x8x2xf32> to vector<8x2xf32>
      %173 = vector.shape_cast %169 : vector<8x2xf32> to vector<8x1x2xf32>
      %174 = vector.broadcast %173 : vector<8x1x2xf32> to vector<8x8x2xf32>
      %175 = vector.broadcast %13 : vector<8x8x1xf32> to vector<8x8x2xf32>
      %176 = arith.addf %174, %175 : vector<8x8x2xf32>
      %cst_39 = arith.constant dense<0xFF800000> : vector<8x2xf32>
      %177 = vector.multi_reduction <maximumf>, %176, %cst_39 [0] : vector<8x8x2xf32> to vector<8x2xf32>
      %178 = vector.shape_cast %177 : vector<8x2xf32> to vector<1x8x2xf32>
      %179 = vector.broadcast %178 : vector<1x8x2xf32> to vector<8x8x2xf32>
      %180 = arith.subf %176, %179 : vector<8x8x2xf32>
      %181 = math.exp %180 : vector<8x8x2xf32>
      %cst_40 = arith.constant dense<0.000000e+00> : vector<8x2xf32>
      %182 = vector.multi_reduction <add>, %181, %cst_40 [0] : vector<8x8x2xf32> to vector<8x2xf32>
      %183 = math.log %182 : vector<8x2xf32>
      %184 = arith.addf %177, %183 : vector<8x2xf32>
      %185 = arith.addf %184, %172 : vector<8x2xf32>
      %186 = arith.addi %0, %c7_i32 : i32
      %187 = vector.broadcast %186 : i32 to vector<1x2xi32>
      %188 = arith.cmpi slt, %187, %14 : vector<1x2xi32>
      %189 = vector.shape_cast %188 : vector<1x2xi1> to vector<1x2xi1>
      %190 = vector.broadcast %189 : vector<1x2xi1> to vector<8x2xi1>
      %191 = arith.select %190, %185, %169 : vector<8x2xi1>, vector<8x2xf32>
      %c8_i32_41 = arith.constant 8 : i32
      %c0_42 = arith.constant 0 : index
      %c0_43 = arith.constant 0 : index
      %192 = vector.load %arg8[%c0_42, %c0_43] : memref<8x2xf32, #tpu.memory_space<vmem>>, vector<8x2xf32>
      tpu.vector_store %arg8[%c0_42, %c0_43], %191 {strides = array<i32>} : memref<8x2xf32, #tpu.memory_space<vmem>>, vector<8x2xf32>,
    } else {
    }
    %c0_i32_2 = arith.constant 0 : i32
    %9 = arith.cmpi eq, %arg1, %c0_i32_2 : i32
    %10 = arith.extui %9 : i1 to i32
    %c0_i32_3 = arith.constant 0 : i32
    %11 = arith.cmpi ne, %10, %c0_i32_3 : i32
    scf.if %11 {
      %c0 = arith.constant 0 : index
      %c0_4 = arith.constant 0 : index
      %12 = vector.load %arg8[%c0, %c0_4] : memref<8x2xf32, #tpu.memory_space<vmem>>, vector<8x2xf32>
      %c0_5 = arith.constant 0 : index
      %c0_6 = arith.constant 0 : index
      %13 = vector.load %arg6[%c0_5, %c0_6] : memref<8x1xf32, #tpu.memory_space<vmem>>, vector<8x1xf32>
      %14 = vector.broadcast %13 : vector<8x1xf32> to vector<8x2xf32>
      %15 = arith.addf %12, %14 : vector<8x2xf32>
      %cst = arith.constant dense<0xFF800000> : vector<2xf32>
      %16 = vector.multi_reduction <maximumf>, %15, %cst [0] : vector<8x2xf32> to vector<2xf32>
      %17 = vector.shape_cast %16 : vector<2xf32> to vector<1x2xf32>
      %18 = vector.broadcast %17 : vector<1x2xf32> to vector<8x2xf32>
      %19 = arith.subf %15, %18 : vector<8x2xf32>
      %20 = math.exp %19 : vector<8x2xf32>
      %cst_7 = arith.constant dense<0.000000e+00> : vector<2xf32>
      %21 = vector.multi_reduction <add>, %20, %cst_7 [0] : vector<8x2xf32> to vector<2xf32>
      %22 = vector.shape_cast %21 : vector<2xf32> to vector<1x2xf32>
      %23 = math.log %22 : vector<1x2xf32>
      %24 = arith.addf %17, %23 : vector<1x2xf32>
      %c0_8 = arith.constant 0 : index
      %c0_9 = arith.constant 0 : index
      %25 = vector.load %arg7[%c0_8, %c0_9] : memref<1x2xf32, #tpu.memory_space<vmem>>, vector<1x2xf32>
      tpu.vector_store %arg7[%c0_8, %c0_9], %24 {strides = array<i32>} : memref<1x2xf32, #tpu.memory_space<vmem>>, vector<1x2xf32>,
    } else {
    }
    return
  }
  func.func @transform_0(%arg0: i32, %arg1: i32, %arg2: memref<1xi32, #tpu.memory_space<smem>>) -> (i32, i32, i32) {
    %c0_i32 = arith.constant 0 : i32
    %c0_i32_0 = arith.constant 0 : i32
    return %arg1, %c0_i32, %arg0 : i32, i32, i32
  }
  func.func @transform_1(%arg0: i32, %arg1: i32, %arg2: memref<1xi32, #tpu.memory_space<smem>>) -> (i32, i32) {
    %c0_i32 = arith.constant 0 : i32
    %c0_i32_0 = arith.constant 0 : i32
    return %c0_i32, %arg0 : i32, i32
  }
  func.func @transform_2(%arg0: i32, %arg1: i32, %arg2: memref<1xi32, #tpu.memory_space<smem>>) -> (i32, i32) {
    %c0_i32 = arith.constant 0 : i32
    %c0_i32_0 = arith.constant 0 : i32
    %c0_i32_1 = arith.constant 0 : i32
    return %c0_i32, %c0_i32_0 : i32, i32
  }
  func.func @transform_3(%arg0: i32, %arg1: i32, %arg2: memref<1xi32, #tpu.memory_space<smem>>) -> (i32, i32) {
    %c0_i32 = arith.constant 0 : i32
    %c0_i32_0 = arith.constant 0 : i32
    %c0_i32_1 = arith.constant 0 : i32
    return %c0_i32, %c0_i32_0 : i32, i32
  }
  func.func @transform_4(%arg0: i32, %arg1: i32, %arg2: memref<1xi32, #tpu.memory_space<smem>>) -> (i32, i32) {
    %c0_i32 = arith.constant 0 : i32
    %c0_i32_0 = arith.constant 0 : i32
    return %c0_i32, %arg0 : i32, i32
  }
}

</mosaic_0001>

<llo_original>
// kernel: tpu_custom_call.1
$region0: #{tpu_custom_call.1}
  #allocation0 [shape = 'u32[]', space=smem, size = 0x4, offset = 0x4, fixed_abs, tag = 'smem constant byte address 0x4 - core index']
  #allocation1 [shape = 'u32[72,128]{1,0:T(1,128)}', space=vmem, size = 0x9000, scoped, tag = 'internal scratch']
  #allocation2 [shape = 'f32[8,2]{1,0:T(8,128)}', space=vmem, size = 0x1000, scoped, tag = 'scratch operand']
  #allocation3 [shape = 's32[1]{0}', space=sflag, size = 0x4, scoped, tag = 'scoped memory for tpu_custom_call.1']
  #allocation4 [shape = 's32[1]{0:T(128)S(6)}', space=smem, size = 0x200, scoped, tag = 'prefetched SMEM operand 0']
  %s0 = inlined_call_operand.<no memory space> [shape: s32[1], index: 0, kind: input, shape index: {}]
  %s1 = inlined_call_operand.vmem [shape: f32[8,8,2], index: 1, kind: input, shape index: {}]
  %s2 = inlined_call_operand.vmem [shape: s32[1,2], index: 2, kind: input, shape index: {}]
  %s3 = inlined_call_operand.vmem [shape: f32[8,8], index: 3, kind: input, shape index: {}]
  %s4 = inlined_call_operand.vmem [shape: f32[8,1], index: 4, kind: input, shape index: {}]
  %s5 = inlined_call_operand.hbm [shape: f32[1,2], index: 5, kind: output, shape index: {}]
  %s6 = sld [smem:[#allocation0]]
  $region38: #{tpu_custom_call.1} parent=0
    _
  %s8 = ssub.s32 1, %s6
  %s9 = scalar_select 0, %s8, %s6
  %10 = sst [smem:[#allocation4]] %s0
  $region1: #{tpu_custom_call.1} parent=0
    #allocation5 [shape = 'u8[512]{0}', space=vmem, size = 0x400, scoped, tag = 'output window, operand 0, single buffered']
    #allocation6 [shape = 's32[1]{0}', space=sflag, size = 0x4, scoped, tag = 'scoped memory for tpu_custom_call.1']
    %11 = vsyncpa [#allocation6], 0
    // Predicated region
    $region2: #{tpu_custom_call.1} parent=1 // pred_check
      _
    $region3: #{tpu_custom_call.1} parent=1 // pred_check_branch
      %13 = sbr.rel (0) target = $region5
    $region4: #{tpu_custom_call.1} parent=1 // pred_region
      _
    $region5: #{tpu_custom_call.1} parent=1 // pred_fallthru
      _
    // Predicated region
    $region6: #{tpu_custom_call.1} parent=1 // pred_check
      _
    $region7: #{tpu_custom_call.1} parent=1 // pred_check_branch
      %15 = sbr.rel (0) target = $region9
    $region8: #{tpu_custom_call.1} parent=1 // pred_region
      _
    $region9: #{tpu_custom_call.1} parent=1 // pred_fallthru
      _
    // Predicated region
    $region10: #{tpu_custom_call.1} parent=1 // pred_check
      _
    $region11: #{tpu_custom_call.1} parent=1 // pred_check_branch
      %17 = sbr.rel (0) target = $region13
    $region12: #{tpu_custom_call.1} parent=1 // pred_region
      _
    $region13: #{tpu_custom_call.1} parent=1 // pred_fallthru
      _
    // Predicated region
    $region14: #{tpu_custom_call.1} parent=1 // pred_check
      _
    $region15: #{tpu_custom_call.1} parent=1 // pred_check_branch
      %19 = sbr.rel (0) target = $region17
    $region16: #{tpu_custom_call.1} parent=1 // pred_region
      _
    $region17: #{tpu_custom_call.1} parent=1 // pred_fallthru
      _
    %s20 = smul.u32 0, 8
    %p21 = scmp.eq.s32.totalorder 0, 0
    // Predicated region
    $region18: #{tpu_custom_call.1} parent=1 // pred_check
      %p22 = pneg %p21
    $region19: #{tpu_custom_call.1} parent=1 // pred_check_branch
      %24 = sbr.rel (%p22) target = $region21
    $region20: #{tpu_custom_call.1} parent=1 // pred_region
      %v25 = vlaneseq
      %v26 = vshrl.u32 %v25, 7
      %vm27 = vcmp.eq.s32.totalorder %v26, 6
      %v28 = vsel %vm27, 0.0, -10000.0
      %vm29 = vcmask 15360
      %30 = vst.msk [vmem:[#allocation2] sm:$0xff] %vm29, %v28
    $region21: #{tpu_custom_call.1} parent=1 // pred_fallthru
      _
    %s31 = sld [smem:[#allocation4]]
    %p32 = scmp.lt.s32.totalorder %s20, %s31
    // Predicated region
    $region22: #{tpu_custom_call.1} parent=1 // pred_check
      %p33 = pneg %p32
    $region23: #{tpu_custom_call.1} parent=1 // pred_check_branch
      %35 = sbr.rel (%p33) target = $region25
    $region24: #{tpu_custom_call.1} parent=1 // pred_region
      %v36 = vld [vmem:[%s3] sm:$0xff]
      %v37 = vperm.slane %v36, 0
      %v38 = vlaneseq
      %v39 = vshrl.u32 %v38, 7
      %41 = vset.pattern.permute.xlu0 %v39
      %42 = vperm.xlu0 %41, %v37
      %v43 = vpop.permute.xlu0 %42
      %v44 = vperm.slane %v36, 1
      %v45 = vlaneseq
      %v46 = vshrl.u32 %v45, 7
      %48 = vset.pattern.permute.xlu0 %v46
      %49 = vperm.xlu0 %48, %v44
      %v50 = vpop.permute.xlu0 %49
      %v51 = vperm.slane %v36, 2
      %v52 = vlaneseq
      %v53 = vshrl.u32 %v52, 7
      %55 = vset.pattern.permute.xlu0 %v53
      %56 = vperm.xlu0 %55, %v51
      %v57 = vpop.permute.xlu0 %56
      %v58 = vperm.slane %v36, 3
      %v59 = vlaneseq
      %v60 = vshrl.u32 %v59, 7
      %62 = vset.pattern.permute.xlu0 %v60
      %63 = vperm.xlu0 %62, %v58
      %v64 = vpop.permute.xlu0 %63
      %v65 = vperm.slane %v36, 4
      %v66 = vlaneseq
      %v67 = vshrl.u32 %v66, 7
      %69 = vset.pattern.permute.xlu0 %v67
      %70 = vperm.xlu0 %69, %v65
      %v71 = vpop.permute.xlu0 %70
      %v72 = vperm.slane %v36, 5
      %v73 = vlaneseq
      %v74 = vshrl.u32 %v73, 7
      %76 = vset.pattern.permute.xlu0 %v74
      %77 = vperm.xlu0 %76, %v72
      %v78 = vpop.permute.xlu0 %77
      %v79 = vperm.slane %v36, 6
      %v80 = vlaneseq
      %v81 = vshrl.u32 %v80, 7
      %83 = vset.pattern.permute.xlu0 %v81
      %84 = vperm.xlu0 %83, %v79
      %v85 = vpop.permute.xlu0 %84
      %v86 = vperm.slane %v36, 7
      %v87 = vlaneseq
      %v88 = vshrl.u32 %v87, 7
      %90 = vset.pattern.permute.xlu0 %v88
      %91 = vperm.xlu0 %90, %v86
      %v92 = vpop.permute.xlu0 %91
      %v93 = vld [vmem:[%s2] sm:$0x1]
      %v94 = vld [vmem:[#allocation2] sm:$0xff]
      %v95 = vld [vmem:[%s1] sm:$0xff]
      %v97 = vrot.slane %v94, 1
      %v98 = vrot.slane %v94, 2
      %v99 = vrot.slane %v94, 3
      %v100 = vrot.slane %v94, 4
      %v101 = vrot.slane %v94, 5
      %v102 = vrot.slane %v94, 6
      %v103 = vrot.slane %v94, 7
      %v104 = vperm.slane %v94, 0
      %v105 = vperm.slane %v97, 0
      %v106 = vperm.slane %v98, 0
      %v107 = vperm.slane %v99, 0
      %v108 = vperm.slane %v100, 0
      %v109 = vperm.slane %v101, 0
      %v110 = vperm.slane %v102, 0
      %v111 = vperm.slane %v103, 0
      %v120 = vadd.f32 %v104, %v43
      %v121 = vadd.f32 %v105, %v50
      %v122 = vadd.f32 %v106, %v57
      %v123 = vadd.f32 %v107, %v64
      %v124 = vadd.f32 %v108, %v71
      %v125 = vadd.f32 %v109, %v78
      %v126 = vadd.f32 %v110, %v85
      %v127 = vadd.f32 %v111, %v92
      %vm128 = vcmask 15360
      %v129 = vsel %vm128, %v120, -inf
      %v130 = vsel %vm128, %v121, -inf
      %v131 = vsel %vm128, %v122, -inf
      %v132 = vsel %vm128, %v123, -inf
      %v133 = vsel %vm128, %v124, -inf
      %v134 = vmax.f32 %v129, %v133
      %v135 = vsel %vm128, %v125, -inf
      %v136 = vmax.f32 %v130, %v135
      %v137 = vsel %vm128, %v126, -inf
      %v138 = vmax.f32 %v131, %v137
      %v139 = vsel %vm128, %v127, -inf
      %v140 = vmax.f32 %v132, %v139
      %v141 = vmax.f32 %v134, %v136
      %v142 = vmax.f32 %v138, %v140
      %v143 = vmax.f32 %v141, %v142
      %v144 = vsub.f32 %v120, %v143
      %v145 = vsub.f32 %v121, %v143
      %v146 = vsub.f32 %v122, %v143
      %v147 = vsub.f32 %v123, %v143
      %v148 = vsub.f32 %v124, %v143
      %v149 = vsub.f32 %v125, %v143
      %v150 = vsub.f32 %v126, %v143
      %v151 = vsub.f32 %v127, %v143
      %v152 = vmul.f32 %v144, 1.442695
      %v153 = vpow.pop %v152
      %v154 = vmul.f32 %v145, 1.442695
      %v155 = vpow.pop %v154
      %v156 = vmul.f32 %v146, 1.442695
      %v157 = vpow.pop %v156
      %v158 = vmul.f32 %v147, 1.442695
      %v159 = vpow.pop %v158
      %v160 = vmul.f32 %v148, 1.442695
      %v161 = vpow.pop %v160
      %v162 = vmul.f32 %v149, 1.442695
      %v163 = vpow.pop %v162
      %v164 = vmul.f32 %v150, 1.442695
      %v165 = vpow.pop %v164
      %v166 = vmul.f32 %v151, 1.442695
      %v167 = vpow.pop %v166
      %v168 = vsel %vm128, %v153, 0.0
      %v169 = vsel %vm128, %v155, 0.0
      %v170 = vadd.f32 %v168, %v169
      %v171 = vsel %vm128, %v157, 0.0
      %v172 = vadd.f32 %v170, %v171
      %v173 = vsel %vm128, %v159, 0.0
      %v174 = vadd.f32 %v172, %v173
      %v175 = vsel %vm128, %v161, 0.0
      %v176 = vadd.f32 %v174, %v175
      %v177 = vsel %vm128, %v163, 0.0
      %v178 = vadd.f32 %v176, %v177
      %v179 = vsel %vm128, %v165, 0.0
      %v180 = vadd.f32 %v178, %v179
      %v181 = vsel %vm128, %v167, 0.0
      %v182 = vadd.f32 %v180, %v181
      %v183 = vlog2.pop %v182
      %v184 = vmul.f32 %v183, 0.6931472
      %v185 = vadd.f32 %v143, %v184
      %v186 = vadd.f32 %v185, %v95
      %v187 = vstv %s20
      %vm188 = vcmp.lt.s32.totalorder %v187, %v93
      %v189 = vsel %vm188, 1, 0
      %v190 = vperm.slane %v189, 0
      %vm191 = vcmp.eq.s32.totalorder %v190, 1
      %v192 = vsel %vm191, %v186, %v94
      %s193 = scalar_lea.vmem %s1, 8
      %v194 = vld [vmem:[%s193] sm:$0xff]
      %v196 = vrot.slane %v192, 1
      %v197 = vrot.slane %v192, 2
      %v198 = vrot.slane %v192, 3
      %v199 = vrot.slane %v192, 4
      %v200 = vrot.slane %v192, 5
      %v201 = vrot.slane %v192, 6
      %v202 = vrot.slane %v192, 7
      %v203 = vperm.slane %v192, 0
      %v204 = vperm.slane %v196, 0
      %v205 = vperm.slane %v197, 0
      %v206 = vperm.slane %v198, 0
      %v207 = vperm.slane %v199, 0
      %v208 = vperm.slane %v200, 0
      %v209 = vperm.slane %v201, 0
      %v210 = vperm.slane %v202, 0
      %v219 = vadd.f32 %v203, %v43
      %v220 = vadd.f32 %v204, %v50
      %v221 = vadd.f32 %v205, %v57
      %v222 = vadd.f32 %v206, %v64
      %v223 = vadd.f32 %v207, %v71
      %v224 = vadd.f32 %v208, %v78
      %v225 = vadd.f32 %v209, %v85
      %v226 = vadd.f32 %v210, %v92
      %v227 = vsel %vm128, %v219, -inf
      %v228 = vsel %vm128, %v220, -inf
      %v229 = vsel %vm128, %v221, -inf
      %v230 = vsel %vm128, %v222, -inf
      %v231 = vsel %vm128, %v223, -inf
      %v232 = vmax.f32 %v227, %v231
      %v233 = vsel %vm128, %v224, -inf
      %v234 = vmax.f32 %v228, %v233
      %v235 = vsel %vm128, %v225, -inf
      %v236 = vmax.f32 %v229, %v235
      %v237 = vsel %vm128, %v226, -inf
      %v238 = vmax.f32 %v230, %v237
      %v239 = vmax.f32 %v232, %v234
      %v240 = vmax.f32 %v236, %v238
      %v241 = vmax.f32 %v239, %v240
      %v242 = vsub.f32 %v219, %v241
      %v243 = vsub.f32 %v220, %v241
      %v244 = vsub.f32 %v221, %v241
      %v245 = vsub.f32 %v222, %v241
      %v246 = vsub.f32 %v223, %v241
      %v247 = vsub.f32 %v224, %v241
      %v248 = vsub.f32 %v225, %v241
      %v249 = vsub.f32 %v226, %v241
      %v250 = vmul.f32 %v242, 1.442695
      %v251 = vpow.pop %v250
      %v252 = vmul.f32 %v243, 1.442695
      %v253 = vpow.pop %v252
      %v254 = vmul.f32 %v244, 1.442695
      %v255 = vpow.pop %v254
      %v256 = vmul.f32 %v245, 1.442695
      %v257 = vpow.pop %v256
      %v258 = vmul.f32 %v246, 1.442695
      %v259 = vpow.pop %v258
      %v260 = vmul.f32 %v247, 1.442695
      %v261 = vpow.pop %v260
      %v262 = vmul.f32 %v248, 1.442695
      %v263 = vpow.pop %v262
      %v264 = vmul.f32 %v249, 1.442695
      %v265 = vpow.pop %v264
      %v266 = vsel %vm128, %v251, 0.0
      %v267 = vsel %vm128, %v253, 0.0
      %v268 = vadd.f32 %v266, %v267
      %v269 = vsel %vm128, %v255, 0.0
      %v270 = vadd.f32 %v268, %v269
      %v271 = vsel %vm128, %v257, 0.0
      %v272 = vadd.f32 %v270, %v271
      %v273 = vsel %vm128, %v259, 0.0
      %v274 = vadd.f32 %v272, %v273
      %v275 = vsel %vm128, %v261, 0.0
      %v276 = vadd.f32 %v274, %v275
      %v277 = vsel %vm128, %v263, 0.0
      %v278 = vadd.f32 %v276, %v277
      %v279 = vsel %vm128, %v265, 0.0
      %v280 = vadd.f32 %v278, %v279
      %v281 = vlog2.pop %v280
      %v282 = vmul.f32 %v281, 0.6931472
      %v283 = vadd.f32 %v241, %v282
      %v284 = vadd.f32 %v283, %v194
      %s285 = sadd.s32 %s20, 1
      %v286 = vstv %s285
      %vm287 = vcmp.lt.s32.totalorder %v286, %v93
      %v288 = vsel %vm287, 1, 0
      %v289 = vperm.slane %v288, 0
      %vm290 = vcmp.eq.s32.totalorder %v289, 1
      %v291 = vsel %vm290, %v284, %v192
      %s292 = scalar_lea.vmem %s1, 16
      %v293 = vld [vmem:[%s292] sm:$0xff]
      %v295 = vrot.slane %v291, 1
      %v296 = vrot.slane %v291, 2
      %v297 = vrot.slane %v291, 3
      %v298 = vrot.slane %v291, 4
      %v299 = vrot.slane %v291, 5
      %v300 = vrot.slane %v291, 6
      %v301 = vrot.slane %v291, 7
      %v302 = vperm.slane %v291, 0
      %v303 = vperm.slane %v295, 0
      %v304 = vperm.slane %v296, 0
      %v305 = vperm.slane %v297, 0
      %v306 = vperm.slane %v298, 0
      %v307 = vperm.slane %v299, 0
      %v308 = vperm.slane %v300, 0
      %v309 = vperm.slane %v301, 0
      %v318 = vadd.f32 %v302, %v43
      %v319 = vadd.f32 %v303, %v50
      %v320 = vadd.f32 %v304, %v57
      %v321 = vadd.f32 %v305, %v64
      %v322 = vadd.f32 %v306, %v71
      %v323 = vadd.f32 %v307, %v78
      %v324 = vadd.f32 %v308, %v85
      %v325 = vadd.f32 %v309, %v92
      %v326 = vsel %vm128, %v318, -inf
      %v327 = vsel %vm128, %v319, -inf
      %v328 = vsel %vm128, %v320, -inf
      %v329 = vsel %vm128, %v321, -inf
      %v330 = vsel %vm128, %v322, -inf
      %v331 = vmax.f32 %v326, %v330
      %v332 = vsel %vm128, %v323, -inf
      %v333 = vmax.f32 %v327, %v332
      %v334 = vsel %vm128, %v324, -inf
      %v335 = vmax.f32 %v328, %v334
      %v336 = vsel %vm128, %v325, -inf
      %v337 = vmax.f32 %v329, %v336
      %v338 = vmax.f32 %v331, %v333
      %v339 = vmax.f32 %v335, %v337
      %v340 = vmax.f32 %v338, %v339
      %v341 = vsub.f32 %v318, %v340
      %v342 = vsub.f32 %v319, %v340
      %v343 = vsub.f32 %v320, %v340
      %v344 = vsub.f32 %v321, %v340
      %v345 = vsub.f32 %v322, %v340
      %v346 = vsub.f32 %v323, %v340
      %v347 = vsub.f32 %v324, %v340
      %v348 = vsub.f32 %v325, %v340
      %v349 = vmul.f32 %v341, 1.442695
      %v350 = vpow.pop %v349
      %v351 = vmul.f32 %v342, 1.442695
      %v352 = vpow.pop %v351
      %v353 = vmul.f32 %v343, 1.442695
      %v354 = vpow.pop %v353
      %v355 = vmul.f32 %v344, 1.442695
      %v356 = vpow.pop %v355
      %v357 = vmul.f32 %v345, 1.442695
      %v358 = vpow.pop %v357
      %v359 = vmul.f32 %v346, 1.442695
      %v360 = vpow.pop %v359
      %v361 = vmul.f32 %v347, 1.442695
      %v362 = vpow.pop %v361
      %v363 = vmul.f32 %v348, 1.442695
      %v364 = vpow.pop %v363
      %v365 = vsel %vm128, %v350, 0.0
      %v366 = vsel %vm128, %v352, 0.0
      %v367 = vadd.f32 %v365, %v366
      %v368 = vsel %vm128, %v354, 0.0
      %v369 = vadd.f32 %v367, %v368
      %v370 = vsel %vm128, %v356, 0.0
      %v371 = vadd.f32 %v369, %v370
      %v372 = vsel %vm128, %v358, 0.0
      %v373 = vadd.f32 %v371, %v372
      %v374 = vsel %vm128, %v360, 0.0
      %v375 = vadd.f32 %v373, %v374
      %v376 = vsel %vm128, %v362, 0.0
      %v377 = vadd.f32 %v375, %v376
      %v378 = vsel %vm128, %v364, 0.0
      %v379 = vadd.f32 %v377, %v378
      %v380 = vlog2.pop %v379
      %v381 = vmul.f32 %v380, 0.6931472
      %v382 = vadd.f32 %v340, %v381
      %v383 = vadd.f32 %v382, %v293
      %s384 = sadd.s32 %s20, 2
      %v385 = vstv %s384
      %vm386 = vcmp.lt.s32.totalorder %v385, %v93
      %v387 = vsel %vm386, 1, 0
      %v388 = vperm.slane %v387, 0
      %vm389 = vcmp.eq.s32.totalorder %v388, 1
      %v390 = vsel %vm389, %v383, %v291
      %s391 = scalar_lea.vmem %s1, 24
      %v392 = vld [vmem:[%s391] sm:$0xff]
      %v394 = vrot.slane %v390, 1
      %v395 = vrot.slane %v390, 2
      %v396 = vrot.slane %v390, 3
      %v397 = vrot.slane %v390, 4
      %v398 = vrot.slane %v390, 5
      %v399 = vrot.slane %v390, 6
      %v400 = vrot.slane %v390, 7
      %v401 = vperm.slane %v390, 0
      %v402 = vperm.slane %v394, 0
      %v403 = vperm.slane %v395, 0
      %v404 = vperm.slane %v396, 0
      %v405 = vperm.slane %v397, 0
      %v406 = vperm.slane %v398, 0
      %v407 = vperm.slane %v399, 0
      %v408 = vperm.slane %v400, 0
      %v417 = vadd.f32 %v401, %v43
      %v418 = vadd.f32 %v402, %v50
      %v419 = vadd.f32 %v403, %v57
      %v420 = vadd.f32 %v404, %v64
      %v421 = vadd.f32 %v405, %v71
      %v422 = vadd.f32 %v406, %v78
      %v423 = vadd.f32 %v407, %v85
      %v424 = vadd.f32 %v408, %v92
      %v425 = vsel %vm128, %v417, -inf
      %v426 = vsel %vm128, %v418, -inf
      %v427 = vsel %vm128, %v419, -inf
      %v428 = vsel %vm128, %v420, -inf
      %v429 = vsel %vm128, %v421, -inf
      %v430 = vmax.f32 %v425, %v429
      %v431 = vsel %vm128, %v422, -inf
      %v432 = vmax.f32 %v426, %v431
      %v433 = vsel %vm128, %v423, -inf
      %v434 = vmax.f32 %v427, %v433
      %v435 = vsel %vm128, %v424, -inf
      %v436 = vmax.f32 %v428, %v435
      %v437 = vmax.f32 %v430, %v432
      %v438 = vmax.f32 %v434, %v436
      %v439 = vmax.f32 %v437, %v438
      %v440 = vsub.f32 %v417, %v439
      %v441 = vsub.f32 %v418, %v439
      %v442 = vsub.f32 %v419, %v439
      %v443 = vsub.f32 %v420, %v439
      %v444 = vsub.f32 %v421, %v439
      %v445 = vsub.f32 %v422, %v439
      %v446 = vsub.f32 %v423, %v439
      %v447 = vsub.f32 %v424, %v439
      %v448 = vmul.f32 %v440, 1.442695
      %v449 = vpow.pop %v448
      %v450 = vmul.f32 %v441, 1.442695
      %v451 = vpow.pop %v450
      %v452 = vmul.f32 %v442, 1.442695
      %v453 = vpow.pop %v452
      %v454 = vmul.f32 %v443, 1.442695
      %v455 = vpow.pop %v454
      %v456 = vmul.f32 %v444, 1.442695
      %v457 = vpow.pop %v456
      %v458 = vmul.f32 %v445, 1.442695
      %v459 = vpow.pop %v458
      %v460 = vmul.f32 %v446, 1.442695
      %v461 = vpow.pop %v460
      %v462 = vmul.f32 %v447, 1.442695
      %v463 = vpow.pop %v462
      %v464 = vsel %vm128, %v449, 0.0
      %v465 = vsel %vm128, %v451, 0.0
      %v466 = vadd.f32 %v464, %v465
      %v467 = vsel %vm128, %v453, 0.0
      %v468 = vadd.f32 %v466, %v467
      %v469 = vsel %vm128, %v455, 0.0
      %v470 = vadd.f32 %v468, %v469
      %v471 = vsel %vm128, %v457, 0.0
      %v472 = vadd.f32 %v470, %v471
      %v473 = vsel %vm128, %v459, 0.0
      %v474 = vadd.f32 %v472, %v473
      %v475 = vsel %vm128, %v461, 0.0
      %v476 = vadd.f32 %v474, %v475
      %v477 = vsel %vm128, %v463, 0.0
      %v478 = vadd.f32 %v476, %v477
      %v479 = vlog2.pop %v478
      %v480 = vmul.f32 %v479, 0.6931472
      %v481 = vadd.f32 %v439, %v480
      %v482 = vadd.f32 %v481, %v392
      %s483 = sadd.s32 %s20, 3
      %v484 = vstv %s483
      %vm485 = vcmp.lt.s32.totalorder %v484, %v93
      %v486 = vsel %vm485, 1, 0
      %v487 = vperm.slane %v486, 0
      %vm488 = vcmp.eq.s32.totalorder %v487, 1
      %v489 = vsel %vm488, %v482, %v390
      %s490 = scalar_lea.vmem %s1, 32
      %v491 = vld [vmem:[%s490] sm:$0xff]
      %v493 = vrot.slane %v489, 1
      %v494 = vrot.slane %v489, 2
      %v495 = vrot.slane %v489, 3
      %v496 = vrot.slane %v489, 4
      %v497 = vrot.slane %v489, 5
      %v498 = vrot.slane %v489, 6
      %v499 = vrot.slane %v489, 7
      %v500 = vperm.slane %v489, 0
      %v501 = vperm.slane %v493, 0
      %v502 = vperm.slane %v494, 0
      %v503 = vperm.slane %v495, 0
      %v504 = vperm.slane %v496, 0
      %v505 = vperm.slane %v497, 0
      %v506 = vperm.slane %v498, 0
      %v507 = vperm.slane %v499, 0
      %v516 = vadd.f32 %v500, %v43
      %v517 = vadd.f32 %v501, %v50
      %v518 = vadd.f32 %v502, %v57
      %v519 = vadd.f32 %v503, %v64
      %v520 = vadd.f32 %v504, %v71
      %v521 = vadd.f32 %v505, %v78
      %v522 = vadd.f32 %v506, %v85
      %v523 = vadd.f32 %v507, %v92
      %v524 = vsel %vm128, %v516, -inf
      %v525 = vsel %vm128, %v517, -inf
      %v526 = vsel %vm128, %v518, -inf
      %v527 = vsel %vm128, %v519, -inf
      %v528 = vsel %vm128, %v520, -inf
      %v529 = vmax.f32 %v524, %v528
      %v530 = vsel %vm128, %v521, -inf
      %v531 = vmax.f32 %v525, %v530
      %v532 = vsel %vm128, %v522, -inf
      %v533 = vmax.f32 %v526, %v532
      %v534 = vsel %vm128, %v523, -inf
      %v535 = vmax.f32 %v527, %v534
      %v536 = vmax.f32 %v529, %v531
      %v537 = vmax.f32 %v533, %v535
      %v538 = vmax.f32 %v536, %v537
      %v539 = vsub.f32 %v516, %v538
      %v540 = vsub.f32 %v517, %v538
      %v541 = vsub.f32 %v518, %v538
      %v542 = vsub.f32 %v519, %v538
      %v543 = vsub.f32 %v520, %v538
      %v544 = vsub.f32 %v521, %v538
      %v545 = vsub.f32 %v522, %v538
      %v546 = vsub.f32 %v523, %v538
      %v547 = vmul.f32 %v539, 1.442695
      %v548 = vpow.pop %v547
      %v549 = vmul.f32 %v540, 1.442695
      %v550 = vpow.pop %v549
      %v551 = vmul.f32 %v541, 1.442695
      %v552 = vpow.pop %v551
      %v553 = vmul.f32 %v542, 1.442695
      %v554 = vpow.pop %v553
      %v555 = vmul.f32 %v543, 1.442695
      %v556 = vpow.pop %v555
      %v557 = vmul.f32 %v544, 1.442695
      %v558 = vpow.pop %v557
      %v559 = vmul.f32 %v545, 1.442695
      %v560 = vpow.pop %v559
      %v561 = vmul.f32 %v546, 1.442695
      %v562 = vpow.pop %v561
      %v563 = vsel %vm128, %v548, 0.0
      %v564 = vsel %vm128, %v550, 0.0
      %v565 = vadd.f32 %v563, %v564
      %v566 = vsel %vm128, %v552, 0.0
      %v567 = vadd.f32 %v565, %v566
      %v568 = vsel %vm128, %v554, 0.0
      %v569 = vadd.f32 %v567, %v568
      %v570 = vsel %vm128, %v556, 0.0
      %v571 = vadd.f32 %v569, %v570
      %v572 = vsel %vm128, %v558, 0.0
      %v573 = vadd.f32 %v571, %v572
      %v574 = vsel %vm128, %v560, 0.0
      %v575 = vadd.f32 %v573, %v574
      %v576 = vsel %vm128, %v562, 0.0
      %v577 = vadd.f32 %v575, %v576
      %v578 = vlog2.pop %v577
      %v579 = vmul.f32 %v578, 0.6931472
      %v580 = vadd.f32 %v538, %v579
      %v581 = vadd.f32 %v580, %v491
      %s582 = sadd.s32 %s20, 4
      %v583 = vstv %s582
      %vm584 = vcmp.lt.s32.totalorder %v583, %v93
      %v585 = vsel %vm584, 1, 0
      %v586 = vperm.slane %v585, 0
      %vm587 = vcmp.eq.s32.totalorder %v586, 1
      %v588 = vsel %vm587, %v581, %v489
      %s589 = scalar_lea.vmem %s1, 40
      %v590 = vld [vmem:[%s589] sm:$0xff]
      %v592 = vrot.slane %v588, 1
      %v593 = vrot.slane %v588, 2
      %v594 = vrot.slane %v588, 3
      %v595 = vrot.slane %v588, 4
      %v596 = vrot.slane %v588, 5
      %v597 = vrot.slane %v588, 6
      %v598 = vrot.slane %v588, 7
      %v599 = vperm.slane %v588, 0
      %v600 = vperm.slane %v592, 0
      %v601 = vperm.slane %v593, 0
      %v602 = vperm.slane %v594, 0
      %v603 = vperm.slane %v595, 0
      %v604 = vperm.slane %v596, 0
      %v605 = vperm.slane %v597, 0
      %v606 = vperm.slane %v598, 0
      %v615 = vadd.f32 %v599, %v43
      %v616 = vadd.f32 %v600, %v50
      %v617 = vadd.f32 %v601, %v57
      %v618 = vadd.f32 %v602, %v64
      %v619 = vadd.f32 %v603, %v71
      %v620 = vadd.f32 %v604, %v78
      %v621 = vadd.f32 %v605, %v85
      %v622 = vadd.f32 %v606, %v92
      %v623 = vsel %vm128, %v615, -inf
      %v624 = vsel %vm128, %v616, -inf
      %v625 = vsel %vm128, %v617, -inf
      %v626 = vsel %vm128, %v618, -inf
      %v627 = vsel %vm128, %v619, -inf
      %v628 = vmax.f32 %v623, %v627
      %v629 = vsel %vm128, %v620, -inf
      %v630 = vmax.f32 %v624, %v629
      %v631 = vsel %vm128, %v621, -inf
      %v632 = vmax.f32 %v625, %v631
      %v633 = vsel %vm128, %v622, -inf
      %v634 = vmax.f32 %v626, %v633
      %v635 = vmax.f32 %v628, %v630
      %v636 = vmax.f32 %v632, %v634
      %v637 = vmax.f32 %v635, %v636
      %v638 = vsub.f32 %v615, %v637
      %v639 = vsub.f32 %v616, %v637
      %v640 = vsub.f32 %v617, %v637
      %v641 = vsub.f32 %v618, %v637
      %v642 = vsub.f32 %v619, %v637
      %v643 = vsub.f32 %v620, %v637
      %v644 = vsub.f32 %v621, %v637
      %v645 = vsub.f32 %v622, %v637
      %v646 = vmul.f32 %v638, 1.442695
      %v647 = vpow.pop %v646
      %v648 = vmul.f32 %v639, 1.442695
      %v649 = vpow.pop %v648
      %v650 = vmul.f32 %v640, 1.442695
      %v651 = vpow.pop %v650
      %v652 = vmul.f32 %v641, 1.442695
      %v653 = vpow.pop %v652
      %v654 = vmul.f32 %v642, 1.442695
      %v655 = vpow.pop %v654
      %v656 = vmul.f32 %v643, 1.442695
      %v657 = vpow.pop %v656
      %v658 = vmul.f32 %v644, 1.442695
      %v659 = vpow.pop %v658
      %v660 = vmul.f32 %v645, 1.442695
      %v661 = vpow.pop %v660
      %v662 = vsel %vm128, %v647, 0.0
      %v663 = vsel %vm128, %v649, 0.0
      %v664 = vadd.f32 %v662, %v663
      %v665 = vsel %vm128, %v651, 0.0
      %v666 = vadd.f32 %v664, %v665
      %v667 = vsel %vm128, %v653, 0.0
      %v668 = vadd.f32 %v666, %v667
      %v669 = vsel %vm128, %v655, 0.0
      %v670 = vadd.f32 %v668, %v669
      %v671 = vsel %vm128, %v657, 0.0
      %v672 = vadd.f32 %v670, %v671
      %v673 = vsel %vm128, %v659, 0.0
      %v674 = vadd.f32 %v672, %v673
      %v675 = vsel %vm128, %v661, 0.0
      %v676 = vadd.f32 %v674, %v675
      %v677 = vlog2.pop %v676
      %v678 = vmul.f32 %v677, 0.6931472
      %v679 = vadd.f32 %v637, %v678
      %v680 = vadd.f32 %v679, %v590
      %s681 = sadd.s32 %s20, 5
      %v682 = vstv %s681
      %vm683 = vcmp.lt.s32.totalorder %v682, %v93
      %v684 = vsel %vm683, 1, 0
      %v685 = vperm.slane %v684, 0
      %vm686 = vcmp.eq.s32.totalorder %v685, 1
      %v687 = vsel %vm686, %v680, %v588
      %s688 = scalar_lea.vmem %s1, 48
      %v689 = vld [vmem:[%s688] sm:$0xff]
      %v691 = vrot.slane %v687, 1
      %v692 = vrot.slane %v687, 2
      %v693 = vrot.slane %v687, 3
      %v694 = vrot.slane %v687, 4
      %v695 = vrot.slane %v687, 5
      %v696 = vrot.slane %v687, 6
      %v697 = vrot.slane %v687, 7
      %v698 = vperm.slane %v687, 0
      %v699 = vperm.slane %v691, 0
      %v700 = vperm.slane %v692, 0
      %v701 = vperm.slane %v693, 0
      %v702 = vperm.slane %v694, 0
      %v703 = vperm.slane %v695, 0
      %v704 = vperm.slane %v696, 0
      %v705 = vperm.slane %v697, 0
      %v714 = vadd.f32 %v698, %v43
      %v715 = vadd.f32 %v699, %v50
      %v716 = vadd.f32 %v700, %v57
      %v717 = vadd.f32 %v701, %v64
      %v718 = vadd.f32 %v702, %v71
      %v719 = vadd.f32 %v703, %v78
      %v720 = vadd.f32 %v704, %v85
      %v721 = vadd.f32 %v705, %v92
      %v722 = vsel %vm128, %v714, -inf
      %v723 = vsel %vm128, %v715, -inf
      %v724 = vsel %vm128, %v716, -inf
      %v725 = vsel %vm128, %v717, -inf
      %v726 = vsel %vm128, %v718, -inf
      %v727 = vmax.f32 %v722, %v726
      %v728 = vsel %vm128, %v719, -inf
      %v729 = vmax.f32 %v723, %v728
      %v730 = vsel %vm128, %v720, -inf
      %v731 = vmax.f32 %v724, %v730
      %v732 = vsel %vm128, %v721, -inf
      %v733 = vmax.f32 %v725, %v732
      %v734 = vmax.f32 %v727, %v729
      %v735 = vmax.f32 %v731, %v733
      %v736 = vmax.f32 %v734, %v735
      %v737 = vsub.f32 %v714, %v736
      %v738 = vsub.f32 %v715, %v736
      %v739 = vsub.f32 %v716, %v736
      %v740 = vsub.f32 %v717, %v736
      %v741 = vsub.f32 %v718, %v736
      %v742 = vsub.f32 %v719, %v736
      %v743 = vsub.f32 %v720, %v736
      %v744 = vsub.f32 %v721, %v736
      %v745 = vmul.f32 %v737, 1.442695
      %v746 = vpow.pop %v745
      %v747 = vmul.f32 %v738, 1.442695
      %v748 = vpow.pop %v747
      %v749 = vmul.f32 %v739, 1.442695
      %v750 = vpow.pop %v749
      %v751 = vmul.f32 %v740, 1.442695
      %v752 = vpow.pop %v751
      %v753 = vmul.f32 %v741, 1.442695
      %v754 = vpow.pop %v753
      %v755 = vmul.f32 %v742, 1.442695
      %v756 = vpow.pop %v755
      %v757 = vmul.f32 %v743, 1.442695
      %v758 = vpow.pop %v757
      %v759 = vmul.f32 %v744, 1.442695
      %v760 = vpow.pop %v759
      %v761 = vsel %vm128, %v746, 0.0
      %v762 = vsel %vm128, %v748, 0.0
      %v763 = vadd.f32 %v761, %v762
      %v764 = vsel %vm128, %v750, 0.0
      %v765 = vadd.f32 %v763, %v764
      %v766 = vsel %vm128, %v752, 0.0
      %v767 = vadd.f32 %v765, %v766
      %v768 = vsel %vm128, %v754, 0.0
      %v769 = vadd.f32 %v767, %v768
      %v770 = vsel %vm128, %v756, 0.0
      %v771 = vadd.f32 %v769, %v770
      %v772 = vsel %vm128, %v758, 0.0
      %v773 = vadd.f32 %v771, %v772
      %v774 = vsel %vm128, %v760, 0.0
      %v775 = vadd.f32 %v773, %v774
      %v776 = vlog2.pop %v775
      %v777 = vmul.f32 %v776, 0.6931472
      %v778 = vadd.f32 %v736, %v777
      %v779 = vadd.f32 %v778, %v689
      %s780 = sadd.s32 %s20, 6
      %v781 = vstv %s780
      %vm782 = vcmp.lt.s32.totalorder %v781, %v93
      %v783 = vsel %vm782, 1, 0
      %v784 = vperm.slane %v783, 0
      %vm785 = vcmp.eq.s32.totalorder %v784, 1
      %v786 = vsel %vm785, %v779, %v687
      %s787 = scalar_lea.vmem %s1, 56
      %v788 = vld [vmem:[%s787] sm:$0xff]
      %v790 = vrot.slane %v786, 1
      %v791 = vrot.slane %v786, 2
      %v792 = vrot.slane %v786, 3
      %v793 = vrot.slane %v786, 4
      %v794 = vrot.slane %v786, 5
      %v795 = vrot.slane %v786, 6
      %v796 = vrot.slane %v786, 7
      %v797 = vperm.slane %v786, 0
      %v798 = vperm.slane %v790, 0
      %v799 = vperm.slane %v791, 0
      %v800 = vperm.slane %v792, 0
      %v801 = vperm.slane %v793, 0
      %v802 = vperm.slane %v794, 0
      %v803 = vperm.slane %v795, 0
      %v804 = vperm.slane %v796, 0
      %v813 = vadd.f32 %v797, %v43
      %v814 = vadd.f32 %v798, %v50
      %v815 = vadd.f32 %v799, %v57
      %v816 = vadd.f32 %v800, %v64
      %v817 = vadd.f32 %v801, %v71
      %v818 = vadd.f32 %v802, %v78
      %v819 = vadd.f32 %v803, %v85
      %v820 = vadd.f32 %v804, %v92
      %v821 = vsel %vm128, %v813, -inf
      %v822 = vsel %vm128, %v814, -inf
      %v823 = vsel %vm128, %v815, -inf
      %v824 = vsel %vm128, %v816, -inf
      %v825 = vsel %vm128, %v817, -inf
      %v826 = vmax.f32 %v821, %v825
      %v827 = vsel %vm128, %v818, -inf
      %v828 = vmax.f32 %v822, %v827
      %v829 = vsel %vm128, %v819, -inf
      %v830 = vmax.f32 %v823, %v829
      %v831 = vsel %vm128, %v820, -inf
      %v832 = vmax.f32 %v824, %v831
      %v833 = vmax.f32 %v826, %v828
      %v834 = vmax.f32 %v830, %v832
      %v835 = vmax.f32 %v833, %v834
      %v836 = vsub.f32 %v813, %v835
      %v837 = vsub.f32 %v814, %v835
      %v838 = vsub.f32 %v815, %v835
      %v839 = vsub.f32 %v816, %v835
      %v840 = vsub.f32 %v817, %v835
      %v841 = vsub.f32 %v818, %v835
      %v842 = vsub.f32 %v819, %v835
      %v843 = vsub.f32 %v820, %v835
      %v844 = vmul.f32 %v836, 1.442695
      %v845 = vpow.pop %v844
      %v846 = vmul.f32 %v837, 1.442695
      %v847 = vpow.pop %v846
      %v848 = vmul.f32 %v838, 1.442695
      %v849 = vpow.pop %v848
      %v850 = vmul.f32 %v839, 1.442695
      %v851 = vpow.pop %v850
      %v852 = vmul.f32 %v840, 1.442695
      %v853 = vpow.pop %v852
      %v854 = vmul.f32 %v841, 1.442695
      %v855 = vpow.pop %v854
      %v856 = vmul.f32 %v842, 1.442695
      %v857 = vpow.pop %v856
      %v858 = vmul.f32 %v843, 1.442695
      %v859 = vpow.pop %v858
      %v860 = vsel %vm128, %v845, 0.0
      %v861 = vsel %vm128, %v847, 0.0
      %v862 = vadd.f32 %v860, %v861
      %v863 = vsel %vm128, %v849, 0.0
      %v864 = vadd.f32 %v862, %v863
      %v865 = vsel %vm128, %v851, 0.0
      %v866 = vadd.f32 %v864, %v865
      %v867 = vsel %vm128, %v853, 0.0
      %v868 = vadd.f32 %v866, %v867
      %v869 = vsel %vm128, %v855, 0.0
      %v870 = vadd.f32 %v868, %v869
      %v871 = vsel %vm128, %v857, 0.0
      %v872 = vadd.f32 %v870, %v871
      %v873 = vsel %vm128, %v859, 0.0
      %v874 = vadd.f32 %v872, %v873
      %v875 = vlog2.pop %v874
      %v876 = vmul.f32 %v875, 0.6931472
      %v877 = vadd.f32 %v835, %v876
      %v878 = vadd.f32 %v877, %v788
      %s879 = sadd.s32 %s20, 7
      %v880 = vstv %s879
      %vm881 = vcmp.lt.s32.totalorder %v880, %v93
      %v882 = vsel %vm881, 1, 0
      %v883 = vperm.slane %v882, 0
      %vm884 = vcmp.eq.s32.totalorder %v883, 1
      %v885 = vsel %vm884, %v878, %v786
      %886 = vst.msk [vmem:[#allocation2] sm:$0xff] %vm128, %v885
    $region25: #{tpu_custom_call.1} parent=1 // pred_fallthru
      _
    // Predicated region
    $region26: #{tpu_custom_call.1} parent=1 // pred_check
      %p887 = pneg %p21
    $region27: #{tpu_custom_call.1} parent=1 // pred_check_branch
      %889 = sbr.rel (%p887) target = $region29
    $region28: #{tpu_custom_call.1} parent=1 // pred_region
      %v890 = vld [vmem:[#allocation2] sm:$0xff]
      %v891 = vld [vmem:[%s4] sm:$0xff]
      %893 = vset.pattern.permute.xlu0 0
      %894 = vperm.xlu0 %893, %v891
      %v895 = vpop.permute.xlu0 %894
      %v897 = vadd.f32 %v890, %v895
      %vm898 = vcmask 15360
      %v899 = vsel %vm898, %v897, -inf
      %v900 = vrot.slane %v899, 4
      %v901 = vmax.f32 %v899, %v900
      %v902 = vrot.slane %v901, 2
      %v903 = vmax.f32 %v901, %v902
      %v904 = vrot.slane %v903, 1
      %v905 = vmax.f32 %v903, %v904
      %v906 = vsub.f32 %v897, %v905
      %v907 = vmul.f32 %v906, 1.442695
      %v908 = vpow.pop %v907
      %v909 = vsel %vm898, %v908, 0.0
      %v910 = vrot.slane %v909, 4
      %v911 = vadd.f32 %v909, %v910
      %v912 = vrot.slane %v911, 2
      %v913 = vadd.f32 %v911, %v912
      %v914 = vrot.slane %v913, 1
      %v915 = vadd.f32 %v913, %v914
      %v916 = vlog2.pop %v915
      %v917 = vmul.f32 %v916, 0.6931472
      %v918 = vadd.f32 %v905, %v917
      %vm919 = vcmask 8192
      %920 = vst.msk [vmem:[#allocation5] sm:$0x1] %vm919, %v918
    $region29: #{tpu_custom_call.1} parent=1 // pred_fallthru
      _
    // Predicated region
    $region30: #{tpu_custom_call.1} parent=1 // pred_check
      _
    $region31: #{tpu_custom_call.1} parent=1 // pred_check_branch
      %922 = sbr.rel (0) target = $region33
    $region32: #{tpu_custom_call.1} parent=1 // pred_region
      %924 = vsyncadd [#allocation6], 0
      %s926 = sshll.u32 [#allocation5], 4
      %s927 = int_to_ptr.vmem [resolvable:$true] %s926
      %s928 = sshll.u32 %s5, 4
      %s929 = int_to_ptr.hbm [resolvable:$true] %s928
      %931 = dma.vmem_to_hbm [thread:$0]  %s927, 16, %s929, [#allocation6]
    $region33: #{tpu_custom_call.1} parent=1 // pred_fallthru
      _
    // Predicated region
    $region34: #{tpu_custom_call.1} parent=1 // pred_check
      _
    $region35: #{tpu_custom_call.1} parent=1 // pred_check_branch
      %933 = sbr.rel (0) target = $region37
    $region36: #{tpu_custom_call.1} parent=1 // pred_region
      %935 = dma.done [#allocation6], 16
    $region37: #{tpu_custom_call.1} parent=1 // pred_fallthru
      _
    %936 = vsyncpa [#allocation6], 1

</llo_original>
